<compile_context>
chip_gen: v5e
topology: v5e:2x2
jax: 0.10.0
libtpu: 0.0.40
codegen_flags: <defaults>
</compile_context>

<pallas_src>
import jax
import jax.numpy as jnp
from jax.experimental import pallas as pl
from jax.experimental.pallas import tpu as pltpu

IN_DIM = 512          # CLIP ViT-B/16 text feature width
EMBED_SIZE = 128      # embed_size of the nn.Linear head
EPS = 1e-8


def _round_up(x, m):
    return ((x + m - 1) // m) * m


def _encoder_text_kernel(x_ref, w_ref, b_ref, feat_ref, mean_ref):
    # x_ref:    (TB, 512) f32  CLIP text features tile
    # w_ref:    (512, E)  f32  Linear weight (transposed vs. torch), VMEM-resident
    # b_ref:    (1, E)    f32  Linear bias, VMEM-resident
    # feat_ref: (TB, E)   f32  l2-normalized features output tile
    # mean_ref: (TB, 1)   f32  per-row mean of the (pre-norm) linear output
    feats = jnp.dot(x_ref[...], w_ref[...], preferred_element_type=jnp.float32)
    feats = feats + b_ref[...]

    # l2norm(X, dim=-1): norm = sqrt(sum(X^2) + eps) + eps ; X / norm
    sq_sum = jnp.sum(feats * feats, axis=-1, keepdims=True)
    norm = jnp.sqrt(sq_sum + EPS) + EPS
    inv_norm = 1.0 / norm                      # exact divide on (TB, 1) only
    feat_ref[...] = feats * inv_norm

    # torch.mean(features, dim=1): row sum * (1/E)
    inv_e = 1.0 / feats.shape[-1]
    mean_ref[...] = jnp.sum(feats, axis=-1, keepdims=True) * inv_e


def _choose_tile(batch, block_b):
    # Multiple of 8 sublanes (f32); aim for >= 2 grid steps (v7x megacore) while
    # capping at block_b (default 1024 keeps f32 double-buffers well inside
    # v5e's 16 MiB scoped-VMEM default and amortizes per-step overhead).
    tb = max(8, _round_up(pl.cdiv(batch, 2), 8))
    tb = min(tb, block_b, _round_up(batch, 8))
    return tb


def encoder_text_clip_head(features, weight, bias, *, block_b=1024):
    """features: (B, 512); weight: (512, E); bias: (E,).

    Returns (l2-normalized features (B, E) f32, per-row mean (B,) f32).
    """
    B, K = features.shape
    E = weight.shape[1]

    x = features.astype(jnp.float32)
    w = weight.astype(jnp.float32)
    b2 = bias.astype(jnp.float32).reshape(1, E)

    tb = _choose_tile(B, block_b)
    grid = (pl.cdiv(B, tb),)   # ragged last block masked by Pallas, no pad/slice

    feat_out, mean_out = pl.pallas_call(
        _encoder_text_kernel,
        grid=grid,
        out_shape=(
            jax.ShapeDtypeStruct((B, E), jnp.float32),
            jax.ShapeDtypeStruct((B, 1), jnp.float32),
        ),
        in_specs=[
            pl.BlockSpec((tb, K), lambda i: (i, 0)),   # batch-tiled activations
            pl.BlockSpec((K, E), lambda i: (0, 0)),    # weight resident across tiles
            pl.BlockSpec((1, E), lambda i: (0, 0)),    # bias resident across tiles
        ],
        out_specs=(
            pl.BlockSpec((tb, E), lambda i: (i, 0)),
            pl.BlockSpec((tb, 1), lambda i: (i, 0)),
        ),
        compiler_params=pltpu.CompilerParams(
            dimension_semantics=("parallel",),   # v7x: shard batch tiles across both TCs
        ),
    )(x, w, b2)

    return feat_out, mean_out[:, 0]


def _reference(features, weight, bias):
    # Pure f32 reference (true module semantics, no quantization of x/W).
    feats = jnp.dot(
        features.astype(jnp.float32), weight.astype(jnp.float32),
        precision=jax.lax.Precision.HIGHEST,
    ) + bias.astype(jnp.float32)
    norm = jnp.sqrt(jnp.sum(feats * feats, axis=-1, keepdims=True) + EPS) + EPS
    return feats / norm, jnp.mean(feats, axis=1)


if __name__ == "__main__":
    key = jax.random.PRNGKey(0)
    k_feat, k_w, k_b = jax.random.split(key, 3)

    B = 8  # small batch of captions
    # synthetic stand-in for clip_model.encode_text(tokens) output (B, 512)
    features = jax.random.normal(k_feat, (B, IN_DIM), dtype=jnp.float32)

    # deterministic nn.Linear(512, embed_size)-style init (uniform in +-1/sqrt(512))
    bound = 1.0 / jnp.sqrt(jnp.float32(IN_DIM))
    weight = jax.random.uniform(
        k_w, (IN_DIM, EMBED_SIZE), minval=-bound, maxval=bound, dtype=jnp.float32
    )
    bias = jax.random.uniform(
        k_b, (EMBED_SIZE,), minval=-bound, maxval=bound, dtype=jnp.float32
    )

    feat_norm, feat_mean = encoder_text_clip_head(features, weight, bias)
    jax.block_until_ready((feat_norm, feat_mean))

    ref_norm, ref_mean = _reference(features, weight, bias)
    assert feat_norm.shape == (B, EMBED_SIZE)
    assert feat_mean.shape == (B,)
    # tolerances absorb MXU matmul precision mode differences vs the XLA reference
    assert jnp.allclose(feat_norm, ref_norm, atol=5e-3, rtol=2e-2)
    assert jnp.allclose(feat_mean, ref_mean, atol=5e-3, rtol=2e-2)

    # second case: B not a tile multiple -> ragged last block, multiple grid steps
    # (block_b=16 with B=40 gives grid=(3,), last block half-masked)
    B2 = 40
    features2 = jax.random.normal(jax.random.PRNGKey(1), (B2, IN_DIM), dtype=jnp.float32)
    fn2, fm2 = encoder_text_clip_head(features2, weight, bias, block_b=16)
    jax.block_until_ready((fn2, fm2))
    rn2, rm2 = _reference(features2, weight, bias)
    assert fn2.shape == (B2, EMBED_SIZE) and fm2.shape == (B2,)
    assert jnp.allclose(fn2, rn2, atol=5e-3, rtol=2e-2)
    assert jnp.allclose(fm2, rm2, atol=5e-3, rtol=2e-2)

    print("KERNEL_OK")
</pallas_src>

<mosaic_0001>
module attributes {stable_mosaic.version = 11 : i64} {
  func.func @_encoder_text_kernel(%arg0: i32, %arg1: memref<8x512xf32, #tpu.memory_space<vmem>>, %arg2: memref<512x128xf32, #tpu.memory_space<vmem>>, %arg3: memref<1x128xf32, #tpu.memory_space<vmem>>, %arg4: memref<8x128xf32, #tpu.memory_space<vmem>>, %arg5: memref<8x1xf32, #tpu.memory_space<vmem>>) attributes {dimension_semantics = [#tpu.dimension_semantics<parallel>], iteration_bounds = array<i64: 1>, scalar_prefetch = 0 : i64, scratch_operands = 0 : i64, tpu.core_type = #tpu.core_type<tc>, window_params = [{transform_indices = @transform_0, window_bounds = array<i64: 8, 512>}, {pipeline_mode = #tpu.pipeline_mode<synchronous>, transform_indices = @transform_1, window_bounds = array<i64: 512, 128>}, {pipeline_mode = #tpu.pipeline_mode<synchronous>, transform_indices = @transform_2, window_bounds = array<i64: 1, 128>}, {transform_indices = @transform_3, window_bounds = array<i64: 8, 128>}, {transform_indices = @transform_4, window_bounds = array<i64: 8, 1>}]} {
    %c0 = arith.constant 0 : index
    %c0_0 = arith.constant 0 : index
    %0 = vector.load %arg1[%c0, %c0_0] : memref<8x512xf32, #tpu.memory_space<vmem>>, vector<8x512xf32>
    %c0_1 = arith.constant 0 : index
    %c0_2 = arith.constant 0 : index
    %1 = vector.load %arg2[%c0_1, %c0_2] : memref<512x128xf32, #tpu.memory_space<vmem>>, vector<512x128xf32>
    %cst = arith.constant dense<0.000000e+00> : vector<8x128xf32>
    %2 = tpu.matmul %0, %1, %cst {dimension_numbers = #tpu.dot_dimension_numbers<[1], [0], [0], [1], [0, 0, 1, 1], [], []>} : vector<8x512xf32>, vector<512x128xf32>, vector<8x128xf32> -> vector<8x128xf32>
    %c0_3 = arith.constant 0 : index
    %c0_4 = arith.constant 0 : index
    %3 = vector.load %arg3[%c0_3, %c0_4] : memref<1x128xf32, #tpu.memory_space<vmem>>, vector<1x128xf32>
    %4 = vector.broadcast %3 : vector<1x128xf32> to vector<8x128xf32>
    %5 = arith.addf %2, %4 : vector<8x128xf32>
    %6 = arith.mulf %5, %5 : vector<8x128xf32>
    %cst_5 = arith.constant dense<0.000000e+00> : vector<8xf32>
    %7 = vector.multi_reduction <add>, %6, %cst_5 [1] : vector<8x128xf32> to vector<8xf32>
    %8 = vector.shape_cast %7 : vector<8xf32> to vector<8x1xf32>
    %cst_6 = arith.constant 9.99999993E-9 : f32
    %9 = vector.broadcast %cst_6 : f32 to vector<8x1xf32>
    %10 = arith.addf %8, %9 : vector<8x1xf32>
    %11 = math.sqrt %10 : vector<8x1xf32>
    %cst_7 = arith.constant 9.99999993E-9 : f32
    %12 = vector.broadcast %cst_7 : f32 to vector<8x1xf32>
    %13 = arith.addf %11, %12 : vector<8x1xf32>
    %cst_8 = arith.constant 1.000000e+00 : f32
    %14 = vector.broadcast %cst_8 : f32 to vector<8x1xf32>
    %15 = arith.divf %14, %13 : vector<8x1xf32>
    %16 = vector.broadcast %15 : vector<8x1xf32> to vector<8x128xf32>
    %17 = arith.mulf %5, %16 : vector<8x128xf32>
    %c0_9 = arith.constant 0 : index
    %c0_10 = arith.constant 0 : index
    %18 = vector.load %arg4[%c0_9, %c0_10] : memref<8x128xf32, #tpu.memory_space<vmem>>, vector<8x128xf32>
    tpu.vector_store %arg4[%c0_9, %c0_10], %17 {strides = array<i32>} : memref<8x128xf32, #tpu.memory_space<vmem>>, vector<8x128xf32>,
    %cst_11 = arith.constant dense<0.000000e+00> : vector<8xf32>
    %19 = vector.multi_reduction <add>, %5, %cst_11 [1] : vector<8x128xf32> to vector<8xf32>
    %20 = vector.shape_cast %19 : vector<8xf32> to vector<8x1xf32>
    %cst_12 = arith.constant 7.812500e-03 : f32
    %21 = vector.broadcast %cst_12 : f32 to vector<8x1xf32>
    %22 = arith.mulf %20, %21 : vector<8x1xf32>
    %c0_13 = arith.constant 0 : index
    %c0_14 = arith.constant 0 : index
    %23 = vector.load %arg5[%c0_13, %c0_14] : memref<8x1xf32, #tpu.memory_space<vmem>>, vector<8x1xf32>
    tpu.vector_store %arg5[%c0_13, %c0_14], %22 {strides = array<i32>} : memref<8x1xf32, #tpu.memory_space<vmem>>, vector<8x1xf32>,
    return
  }
  func.func @transform_0(%arg0: i32) -> (i32, i32) {
    %c0_i32 = arith.constant 0 : i32
    %c0_i32_0 = arith.constant 0 : i32
    return %arg0, %c0_i32 : i32, i32
  }
  func.func @transform_1(%arg0: i32) -> (i32, i32) {
    %c0_i32 = arith.constant 0 : i32
    %c0_i32_0 = arith.constant 0 : i32
    %c0_i32_1 = arith.constant 0 : i32
    return %c0_i32, %c0_i32_0 : i32, i32
  }
  func.func @transform_2(%arg0: i32) -> (i32, i32) {
    %c0_i32 = arith.constant 0 : i32
    %c0_i32_0 = arith.constant 0 : i32
    %c0_i32_1 = arith.constant 0 : i32
    return %c0_i32, %c0_i32_0 : i32, i32
  }
  func.func @transform_3(%arg0: i32) -> (i32, i32) {
    %c0_i32 = arith.constant 0 : i32
    %c0_i32_0 = arith.constant 0 : i32
    return %arg0, %c0_i32 : i32, i32
  }
  func.func @transform_4(%arg0: i32) -> (i32, i32) {
    %c0_i32 = arith.constant 0 : i32
    %c0_i32_0 = arith.constant 0 : i32
    return %arg0, %c0_i32 : i32, i32
  }
}

</mosaic_0001>

<llo_original>
// kernel: tpu_custom_call.1
$region0: #{tpu_custom_call.1}
  #allocation0 [shape = 'u32[]', space=smem, size = 0x4, offset = 0x4, fixed_abs, tag = 'smem constant byte address 0x4 - core index']
  #allocation1 [shape = 'u32[72,128]{1,0:T(1,128)}', space=vmem, size = 0x9000, scoped, tag = 'internal scratch']
  %s0 = inlined_call_operand.hbm [shape: f32[8,512], index: 0, kind: input, shape index: {}]
  %s1 = inlined_call_operand.hbm [shape: f32[512,128], index: 1, kind: input, shape index: {}]
  %s2 = inlined_call_operand.vmem [shape: f32[1,128], index: 2, kind: input, shape index: {}]
  %s3 = inlined_call_operand.hbm [shape: f32[8,128], index: 3, kind: output, shape index: {0}]
  %s4 = inlined_call_operand.vmem [shape: f32[8,1], index: 4, kind: output, shape index: {1}]
  %5 = xla_tuple %s3, %s4
  %s6 = sld [smem:[#allocation0]]
  $region38: #{tpu_custom_call.1} parent=0
    _
  %s8 = ssub.s32 1, %s6
  %s9 = scalar_select 0, %s8, %s6
  $region1: #{tpu_custom_call.1} parent=0
    #allocation2 [shape = 'u8[16384]{0}', space=vmem, size = 0x4000, scoped, tag = 'input window, operand 0, single buffered']
    #allocation3 [shape = 's32[1]{0}', space=sflag, size = 0x4, scoped, tag = 'scoped memory for tpu_custom_call.1']
    #allocation4 [shape = 's32[1]{0}', space=sflag, size = 0x4, scoped, tag = 'scoped memory for tpu_custom_call.1']
    #allocation5 [shape = 'u8[262144]{0}', space=vmem, size = 0x40000, scoped, tag = 'input window, operand 1, single buffered']
    #allocation6 [shape = 's32[1]{0}', space=sflag, size = 0x4, scoped, tag = 'scoped memory for tpu_custom_call.1']
    #allocation7 [shape = 'u8[4096]{0}', space=vmem, size = 0x1000, scoped, tag = 'output window, operand 0, single buffered']
    %10 = vsyncpa [#allocation3], 0
    %11 = vsyncpa [#allocation6], 0
    %12 = vsyncpa [#allocation4], 0
    // Predicated region
    $region2: #{tpu_custom_call.1} parent=1 // pred_check
      _
    $region3: #{tpu_custom_call.1} parent=1 // pred_check_branch
      %14 = sbr.rel (0) target = $region5
    $region4: #{tpu_custom_call.1} parent=1 // pred_region
      %16 = vsyncadd [#allocation3], 0
      %s18 = sshll.u32 %s0, 4
      %s19 = int_to_ptr.hbm [resolvable:$true] %s18
      %s20 = sshll.u32 [#allocation2], 4
      %s21 = int_to_ptr.vmem [resolvable:$true] %s20
      %23 = dma.hbm_to_vmem [thread:$0]  %s19, 512, %s21, [#allocation3]
    $region5: #{tpu_custom_call.1} parent=1 // pred_fallthru
      _
    // Predicated region
    $region6: #{tpu_custom_call.1} parent=1 // pred_check
      _
    $region7: #{tpu_custom_call.1} parent=1 // pred_check_branch
      %25 = sbr.rel (0) target = $region9
    $region8: #{tpu_custom_call.1} parent=1 // pred_region
      %27 = vsyncadd [#allocation6], 0
      %s28 = sshll.u32 %s1, 4
      %s29 = int_to_ptr.hbm [resolvable:$true] %s28
      %s30 = sshll.u32 [#allocation5], 4
      %s31 = int_to_ptr.vmem [resolvable:$true] %s30
      %36 = dma.hbm_to_vmem [thread:$0]  %s29, 8192, %s31, [#allocation6], 128, 128, 8
    $region9: #{tpu_custom_call.1} parent=1 // pred_fallthru
      _
    // Predicated region
    $region10: #{tpu_custom_call.1} parent=1 // pred_check
      _
    $region11: #{tpu_custom_call.1} parent=1 // pred_check_branch
      %38 = sbr.rel (0) target = $region13
    $region12: #{tpu_custom_call.1} parent=1 // pred_region
      _
    $region13: #{tpu_custom_call.1} parent=1 // pred_fallthru
      _
    // Predicated region
    $region14: #{tpu_custom_call.1} parent=1 // pred_check
      _
    $region15: #{tpu_custom_call.1} parent=1 // pred_check_branch
      %40 = sbr.rel (0) target = $region17
    $region16: #{tpu_custom_call.1} parent=1 // pred_region
      %42 = dma.done [#allocation3], 512
    $region17: #{tpu_custom_call.1} parent=1 // pred_fallthru
      _
    // Predicated region
    $region18: #{tpu_custom_call.1} parent=1 // pred_check
      _
    $region19: #{tpu_custom_call.1} parent=1 // pred_check_branch
      %44 = sbr.rel (0) target = $region21
    $region20: #{tpu_custom_call.1} parent=1 // pred_region
      %46 = dma.done [#allocation6], 8192
    $region21: #{tpu_custom_call.1} parent=1 // pred_fallthru
      _
    %v47 = vld [vmem:[#allocation2] sm:$0xff]
    %v48 = vld [vmem:[#allocation2 + $0x8] sm:$0xff]
    %v49 = vld [vmem:[#allocation2 + $0x10] sm:$0xff]
    %v50 = vld [vmem:[#allocation2 + $0x18] sm:$0xff]
    %v51 = vld [vmem:[#allocation5] sm:$0xff]
    %v52 = vld [vmem:[#allocation5 + $0x8] sm:$0xff]
    %v53 = vld [vmem:[#allocation5 + $0x10] sm:$0xff]
    %v54 = vld [vmem:[#allocation5 + $0x18] sm:$0xff]
    %v55 = vld [vmem:[#allocation5 + $0x20] sm:$0xff]
    %v56 = vld [vmem:[#allocation5 + $0x28] sm:$0xff]
    %v57 = vld [vmem:[#allocation5 + $0x30] sm:$0xff]
    %v58 = vld [vmem:[#allocation5 + $0x38] sm:$0xff]
    %v59 = vld [vmem:[#allocation5 + $0x40] sm:$0xff]
    %v60 = vld [vmem:[#allocation5 + $0x48] sm:$0xff]
    %v61 = vld [vmem:[#allocation5 + $0x50] sm:$0xff]
    %v62 = vld [vmem:[#allocation5 + $0x58] sm:$0xff]
    %v63 = vld [vmem:[#allocation5 + $0x60] sm:$0xff]
    %v64 = vld [vmem:[#allocation5 + $0x68] sm:$0xff]
    %v65 = vld [vmem:[#allocation5 + $0x70] sm:$0xff]
    %v66 = vld [vmem:[#allocation5 + $0x78] sm:$0xff]
    %v67 = vld [vmem:[#allocation5 + $0x80] sm:$0xff]
    %v68 = vld [vmem:[#allocation5 + $0x88] sm:$0xff]
    %v69 = vld [vmem:[#allocation5 + $0x90] sm:$0xff]
    %v70 = vld [vmem:[#allocation5 + $0x98] sm:$0xff]
    %v71 = vld [vmem:[#allocation5 + $0xa0] sm:$0xff]
    %v72 = vld [vmem:[#allocation5 + $0xa8] sm:$0xff]
    %v73 = vld [vmem:[#allocation5 + $0xb0] sm:$0xff]
    %v74 = vld [vmem:[#allocation5 + $0xb8] sm:$0xff]
    %v75 = vld [vmem:[#allocation5 + $0xc0] sm:$0xff]
    %v76 = vld [vmem:[#allocation5 + $0xc8] sm:$0xff]
    %v77 = vld [vmem:[#allocation5 + $0xd0] sm:$0xff]
    %v78 = vld [vmem:[#allocation5 + $0xd8] sm:$0xff]
    %v79 = vld [vmem:[#allocation5 + $0xe0] sm:$0xff]
    %v80 = vld [vmem:[#allocation5 + $0xe8] sm:$0xff]
    %v81 = vld [vmem:[#allocation5 + $0xf0] sm:$0xff]
    %v82 = vld [vmem:[#allocation5 + $0xf8] sm:$0xff]
    %v83 = vld [vmem:[#allocation5 + $0x100] sm:$0xff]
    %v84 = vld [vmem:[#allocation5 + $0x108] sm:$0xff]
    %v85 = vld [vmem:[#allocation5 + $0x110] sm:$0xff]
    %v86 = vld [vmem:[#allocation5 + $0x118] sm:$0xff]
    %v87 = vld [vmem:[#allocation5 + $0x120] sm:$0xff]
    %v88 = vld [vmem:[#allocation5 + $0x128] sm:$0xff]
    %v89 = vld [vmem:[#allocation5 + $0x130] sm:$0xff]
    %v90 = vld [vmem:[#allocation5 + $0x138] sm:$0xff]
    %v91 = vld [vmem:[#allocation5 + $0x140] sm:$0xff]
    %v92 = vld [vmem:[#allocation5 + $0x148] sm:$0xff]
    %v93 = vld [vmem:[#allocation5 + $0x150] sm:$0xff]
    %v94 = vld [vmem:[#allocation5 + $0x158] sm:$0xff]
    %v95 = vld [vmem:[#allocation5 + $0x160] sm:$0xff]
    %v96 = vld [vmem:[#allocation5 + $0x168] sm:$0xff]
    %v97 = vld [vmem:[#allocation5 + $0x170] sm:$0xff]
    %v98 = vld [vmem:[#allocation5 + $0x178] sm:$0xff]
    %v99 = vld [vmem:[#allocation5 + $0x180] sm:$0xff]
    %v100 = vld [vmem:[#allocation5 + $0x188] sm:$0xff]
    %v101 = vld [vmem:[#allocation5 + $0x190] sm:$0xff]
    %v102 = vld [vmem:[#allocation5 + $0x198] sm:$0xff]
    %v103 = vld [vmem:[#allocation5 + $0x1a0] sm:$0xff]
    %v104 = vld [vmem:[#allocation5 + $0x1a8] sm:$0xff]
    %v105 = vld [vmem:[#allocation5 + $0x1b0] sm:$0xff]
    %v106 = vld [vmem:[#allocation5 + $0x1b8] sm:$0xff]
    %v107 = vld [vmem:[#allocation5 + $0x1c0] sm:$0xff]
    %v108 = vld [vmem:[#allocation5 + $0x1c8] sm:$0xff]
    %v109 = vld [vmem:[#allocation5 + $0x1d0] sm:$0xff]
    %v110 = vld [vmem:[#allocation5 + $0x1d8] sm:$0xff]
    %v111 = vld [vmem:[#allocation5 + $0x1e0] sm:$0xff]
    %v112 = vld [vmem:[#allocation5 + $0x1e8] sm:$0xff]
    %v113 = vld [vmem:[#allocation5 + $0x1f0] sm:$0xff]
    %v114 = vld [vmem:[#allocation5 + $0x1f8] sm:$0xff]
    %v115 = vld [vmem:[%s2] sm:$0x1]
    %v117 = vperm.slane %v115, 0
    %119 = vmatpush.msra.mxu0 %v66
    %120 = vmatpush.msra.mxu0 %v65
    %121 = vmatpush.msra.mxu0 %v64
    %122 = vmatpush.msra.mxu0 %v63
    %123 = vmatpush.msra.mxu0 %v62
    %124 = vmatpush.msra.mxu0 %v61
    %125 = vmatpush.msra.mxu0 %v60
    %126 = vmatpush.msra.mxu0 %v59
    %127 = vmatpush.msra.mxu0 %v58
    %128 = vmatpush.msra.mxu0 %v57
    %129 = vmatpush.msra.mxu0 %v56
    %130 = vmatpush.msra.mxu0 %v55
    %131 = vmatpush.msra.mxu0 %v54
    %132 = vmatpush.msra.mxu0 %v53
    %133 = vmatpush.msra.mxu0 %v52
    %134 = vmatpush.msra.mxu0 %v51
    %135 = vmatmul.f32.gmra.mxu0 %v47
    %v136 = vpop.f32.mrf.mxu0
    %v137 = vadd.f32 %v117, %v136
    %138 = vdwg.mxu0
    %139 = vmatpush.msra.mxu0 %v82
    %140 = vmatpush.msra.mxu0 %v81
    %141 = vmatpush.msra.mxu0 %v80
    %142 = vmatpush.msra.mxu0 %v79
    %143 = vmatpush.msra.mxu0 %v78
    %144 = vmatpush.msra.mxu0 %v77
    %145 = vmatpush.msra.mxu0 %v76
    %146 = vmatpush.msra.mxu0 %v75
    %147 = vmatpush.msra.mxu0 %v74
    %148 = vmatpush.msra.mxu0 %v73
    %149 = vmatpush.msra.mxu0 %v72
    %150 = vmatpush.msra.mxu0 %v71
    %151 = vmatpush.msra.mxu0 %v70
    %152 = vmatpush.msra.mxu0 %v69
    %153 = vmatpush.msra.mxu0 %v68
    %154 = vmatpush.msra.mxu0 %v67
    %155 = vmatmul.f32.gmra.mxu0 %v48
    %v156 = vpop.f32.mrf.mxu0
    %v157 = vadd.f32 %v137, %v156
    %158 = vdwg.mxu0
    %159 = vmatpush.msra.mxu0 %v98
    %160 = vmatpush.msra.mxu0 %v97
    %161 = vmatpush.msra.mxu0 %v96
    %162 = vmatpush.msra.mxu0 %v95
    %163 = vmatpush.msra.mxu0 %v94
    %164 = vmatpush.msra.mxu0 %v93
    %165 = vmatpush.msra.mxu0 %v92
    %166 = vmatpush.msra.mxu0 %v91
    %167 = vmatpush.msra.mxu0 %v90
    %168 = vmatpush.msra.mxu0 %v89
    %169 = vmatpush.msra.mxu0 %v88
    %170 = vmatpush.msra.mxu0 %v87
    %171 = vmatpush.msra.mxu0 %v86
    %172 = vmatpush.msra.mxu0 %v85
    %173 = vmatpush.msra.mxu0 %v84
    %174 = vmatpush.msra.mxu0 %v83
    %175 = vmatmul.f32.gmra.mxu0 %v49
    %v176 = vpop.f32.mrf.mxu0
    %v177 = vadd.f32 %v157, %v176
    %178 = vdwg.mxu0
    %179 = vmatpush.msra.mxu0 %v114
    %180 = vmatpush.msra.mxu0 %v113
    %181 = vmatpush.msra.mxu0 %v112
    %182 = vmatpush.msra.mxu0 %v111
    %183 = vmatpush.msra.mxu0 %v110
    %184 = vmatpush.msra.mxu0 %v109
    %185 = vmatpush.msra.mxu0 %v108
    %186 = vmatpush.msra.mxu0 %v107
    %187 = vmatpush.msra.mxu0 %v106
    %188 = vmatpush.msra.mxu0 %v105
    %189 = vmatpush.msra.mxu0 %v104
    %190 = vmatpush.msra.mxu0 %v103
    %191 = vmatpush.msra.mxu0 %v102
    %192 = vmatpush.msra.mxu0 %v101
    %193 = vmatpush.msra.mxu0 %v100
    %194 = vmatpush.msra.mxu0 %v99
    %195 = vmatmul.f32.gmra.mxu0 %v50
    %v196 = vpop.f32.mrf.mxu0
    %v197 = vadd.f32 %v177, %v196
    %198 = vdwg.mxu0
    %v199 = vmul.f32 %v197, %v197
    %200 = vadd.xlane.f32.xlu0 %v199
    %v201 = vpop.xlane.xlu0 %200
    %v202 = vadd.f32 %v201, 1e-08
    %v203 = vrsqrt.pop %v202
    %v204 = vmul.f32 %v203, %v202
    %v205 = vmul.f32 %v204, %v203
    %v206 = vmul.f32 0.5, %v205
    %v207 = vsub.f32 1.5, %v206
    %v208 = vmul.f32 %v203, %v207
    %v209 = vmul.f32 %v202, %v208
    %vm210 = vcmp.eq.f32.partialorder %v202, inf
    %v211 = vsel %vm210, %v202, %v209
    %vm212 = vcmp.eq.f32.partialorder %v202, 0.0
    %v213 = vand.u32 %v202, 2147483648
    %v214 = vsel %vm212, %v213, %v211
    %v215 = vadd.f32 %v214, 1e-08
    %v216 = vrcp.pop %v215
    %v217 = vmul.f32 %v215, %v216
    %v218 = vsub.f32 1.0, %v217
    %v219 = vmul.f32 %v216, %v218
    %v220 = vadd.f32 %v216, %v219
    %vm221 = vweird.f32 %v215
    %vm222 = vweird.f32 %v216
    %vm223 = vmor %vm221, %vm222
    %v224 = vsel %vm223, %v216, %v220
    %v225 = vand.u32 2147483647, %v215
    %vm226 = vcmp.eq.f32.partialorder %v225, 8.507059e+37
    %v227 = vand.u32 %v215, 2147483648
    %v228 = vor.u32 1.1754944e-38, %v227
    %v229 = vsel %vm226, %v228, %v224
    %v230 = vmul.f32 1.0, %v229
    %v231 = vmul.f32 %v197, %v230
    %232 = vst [vmem:[#allocation7] sm:$0xff] %v231
    %233 = vadd.xlane.f32.xlu0 %v197
    %v234 = vpop.xlane.xlu0 %233
    %v235 = vmul.f32 %v234, 0.0078125
    %vm236 = vcmask 7168
    %237 = vst.msk [vmem:[%s4] sm:$0xff] %vm236, %v235
    // Predicated region
    $region22: #{tpu_custom_call.1} parent=1 // pred_check
      _
    $region23: #{tpu_custom_call.1} parent=1 // pred_check_branch
      %239 = sbr.rel (0) target = $region25
    $region24: #{tpu_custom_call.1} parent=1 // pred_region
      %241 = vsyncadd [#allocation4], 0
      %s243 = sshll.u32 [#allocation7], 4
      %s244 = int_to_ptr.vmem [resolvable:$true] %s243
      %s245 = sshll.u32 %s3, 4
      %s246 = int_to_ptr.hbm [resolvable:$true] %s245
      %248 = dma.vmem_to_hbm [thread:$0]  %s244, 128, %s246, [#allocation4]
    $region25: #{tpu_custom_call.1} parent=1 // pred_fallthru
      _
    // Predicated region
    $region26: #{tpu_custom_call.1} parent=1 // pred_check
      _
    $region27: #{tpu_custom_call.1} parent=1 // pred_check_branch
      %250 = sbr.rel (0) target = $region29
    $region28: #{tpu_custom_call.1} parent=1 // pred_region
      _
    $region29: #{tpu_custom_call.1} parent=1 // pred_fallthru
      _
    // Predicated region
    $region30: #{tpu_custom_call.1} parent=1 // pred_check
      _
    $region31: #{tpu_custom_call.1} parent=1 // pred_check_branch
      %252 = sbr.rel (0) target = $region33
    $region32: #{tpu_custom_call.1} parent=1 // pred_region
      %254 = dma.done [#allocation4], 128
    $region33: #{tpu_custom_call.1} parent=1 // pred_fallthru
      _
    // Predicated region
    $region34: #{tpu_custom_call.1} parent=1 // pred_check
      _
    $region35: #{tpu_custom_call.1} parent=1 // pred_check_branch
      %256 = sbr.rel (0) target = $region37
    $region36: #{tpu_custom_call.1} parent=1 // pred_region
      _
    $region37: #{tpu_custom_call.1} parent=1 // pred_fallthru
      _
    %257 = vsyncpa [#allocation3], 1
    %258 = vsyncpa [#allocation6], 1
    %259 = vsyncpa [#allocation4], 1

</llo_original>
